<compile_context>
chip_gen: v6e
topology: v6e:2x2x1
jax: 0.10.0
libtpu: 0.0.40
codegen_flags: <defaults>
</compile_context>

<pallas_src>
import jax
import jax.numpy as jnp
from jax.experimental import pallas as pl
from jax.experimental.pallas import tpu as pltpu

_LANES = 128          # lane-dense last dim (unmasked vector stores)
_MAX_TILE_ROWS = 1024 # 1024 x 128 x 4B = 512 KiB per tile; ~2 MiB resident


def _clean_kernel(text_ref, out_ref):
    # Identity "cleaning": copy the token-id tile through VMEM unchanged.
    out_ref[...] = text_ref[...]


def text_preprocess_seg_dict(text_ids: jax.Array) -> jax.Array:
    """Pallas implementation of TextPreprocessSegDict.forward.

    Args:
      text_ids: (batch, seq_len) integer token ids.

    Returns:
      (batch, seq_len) token ids, identical to the input (identity cleaner,
      matching TextCleaner(None)).
    """
    orig_shape = text_ids.shape
    dtype = text_ids.dtype
    total = 1
    for d in orig_shape:
        total *= d

    # Lane-dense slab: flatten, pad, reshape to (rows, 128).
    rows_needed = pl.cdiv(total, _LANES)
    rows_8 = pl.cdiv(rows_needed, 8) * 8            # sublane-aligned
    tile_rows = min(_MAX_TILE_ROWS, rows_8)         # tile height (multiple of 8)
    rows = pl.cdiv(rows_8, tile_rows) * tile_rows   # grid-aligned row count
    padded_total = rows * _LANES

    flat = jnp.reshape(text_ids, (-1,))
    if padded_total != total:
        flat = jnp.pad(flat, (0, padded_total - total))
    x2d = jnp.reshape(flat, (rows, _LANES))

    out2d = pl.pallas_call(
        _clean_kernel,
        out_shape=jax.ShapeDtypeStruct((rows, _LANES), dtype),
        grid=(rows // tile_rows,),
        in_specs=[pl.BlockSpec((tile_rows, _LANES), lambda i: (i, 0))],
        out_specs=pl.BlockSpec((tile_rows, _LANES), lambda i: (i, 0)),
        # Output is the donated (wrapper-created) input buffer: no separate
        # output allocation and XLA can elide the extra copy.
        input_output_aliases={0: 0},
        compiler_params=pltpu.CompilerParams(
            dimension_semantics=("parallel",)
        ),
    )(x2d)

    return jnp.reshape(jnp.reshape(out2d, (-1,))[:total], orig_shape)


if __name__ == "__main__":
    key = jax.random.PRNGKey(0)
    batch, seq_len, vocab = 2, 16, 512
    # Deterministic synthetic "text": token ids in [0, vocab).
    text_ids = jax.random.randint(
        key, (batch, seq_len), minval=0, maxval=vocab, dtype=jnp.int32
    )

    out = text_preprocess_seg_dict(text_ids)
    out = jax.block_until_ready(out)

    # Forward is the identity cleaner: output must equal input exactly.
    assert out.shape == text_ids.shape
    assert out.dtype == text_ids.dtype
    assert bool(jnp.all(out == text_ids))

    print("KERNEL_OK")
</pallas_src>

<mosaic_0001>
module attributes {stable_mosaic.version = 11 : i64} {
  func.func @_clean_kernel(%arg0: i32, %arg1: memref<8x128xi32, #tpu.memory_space<vmem>>, %arg2: memref<8x128xi32, #tpu.memory_space<vmem>>) attributes {dimension_semantics = [#tpu.dimension_semantics<parallel>], iteration_bounds = array<i64: 1>, scalar_prefetch = 0 : i64, scratch_operands = 0 : i64, tpu.core_type = #tpu.core_type<tc>, window_params = [{transform_indices = @transform_0, window_bounds = array<i64: 8, 128>}, {transform_indices = @transform_1, window_bounds = array<i64: 8, 128>}]} {
    %c0 = arith.constant 0 : index
    %c0_0 = arith.constant 0 : index
    %0 = vector.load %arg1[%c0, %c0_0] : memref<8x128xi32, #tpu.memory_space<vmem>>, vector<8x128xi32>
    %c0_1 = arith.constant 0 : index
    %c0_2 = arith.constant 0 : index
    %1 = vector.load %arg2[%c0_1, %c0_2] : memref<8x128xi32, #tpu.memory_space<vmem>>, vector<8x128xi32>
    tpu.vector_store %arg2[%c0_1, %c0_2], %0 {strides = array<i32>} : memref<8x128xi32, #tpu.memory_space<vmem>>, vector<8x128xi32>,
    return
  }
  func.func @transform_0(%arg0: i32) -> (i32, i32) {
    %c0_i32 = arith.constant 0 : i32
    %c0_i32_0 = arith.constant 0 : i32
    return %arg0, %c0_i32 : i32, i32
  }
  func.func @transform_1(%arg0: i32) -> (i32, i32) {
    %c0_i32 = arith.constant 0 : i32
    %c0_i32_0 = arith.constant 0 : i32
    return %arg0, %c0_i32 : i32, i32
  }
}

</mosaic_0001>

<llo_original>
// kernel: tpu_custom_call.1
$region0: #{tpu_custom_call.1}
  #allocation0 [shape = 'u32[]', space=smem, size = 0x4, offset = 0x4, fixed_abs, tag = 'smem constant byte address 0x4 - core index']
  #allocation1 [shape = 'u32[144,128]{1,0:T(1,128)}', space=vmem, size = 0x12000, scoped, tag = 'internal scratch']
  %s0 = inlined_call_operand.hbm [shape: s32[8,128], index: 0, kind: input, shape index: {}, may-alias: {0,1}]
  %s1 = inlined_call_operand.hbm [shape: s32[8,128], index: 1, kind: output, shape index: {}, may-alias: {0,1}]
  %s2 = sld [smem:[#allocation0]]
  $region18: #{tpu_custom_call.1} parent=0
    _
  %s4 = ssub.s32 1, %s2
  %s5 = scalar_select 0, %s4, %s2
  $region1: #{tpu_custom_call.1} parent=0
    #allocation2 [shape = 'u8[4096]{0}', space=vmem, size = 0x1000, scoped, tag = 'input window, operand 0, single buffered']
    #allocation3 [shape = 's32[1]{0}', space=sflag, size = 0x4, scoped, tag = 'scoped memory for tpu_custom_call.1']
    #allocation4 [shape = 's32[1]{0}', space=sflag, size = 0x4, scoped, tag = 'scoped memory for tpu_custom_call.1']
    #allocation5 [shape = 'u8[4096]{0}', space=vmem, size = 0x1000, scoped, tag = 'output window, operand 0, single buffered']
    %6 = vsyncpa [#allocation3], 0
    %7 = vsyncpa [#allocation4], 0
    // Predicated region
    $region2: #{tpu_custom_call.1} parent=1 // pred_check
      _
    $region3: #{tpu_custom_call.1} parent=1 // pred_check_branch
      %9 = sbr.rel (0) target = $region5
    $region4: #{tpu_custom_call.1} parent=1 // pred_region
      %s11 = ssub.s32 128, 128
      %12 = vsyncadd [#allocation3], %s11
      %s14 = sshll.u32 [#allocation2], 4
      %s15 = int_to_ptr.vmem [resolvable:$true] %s14
      %17 = dma.hbm_to_vmem [thread:$0]  %s0, 128, %s15, [#allocation3]
    $region5: #{tpu_custom_call.1} parent=1 // pred_fallthru
      _
    // Predicated region
    $region6: #{tpu_custom_call.1} parent=1 // pred_check
      _
    $region7: #{tpu_custom_call.1} parent=1 // pred_check_branch
      %19 = sbr.rel (0) target = $region9
    $region8: #{tpu_custom_call.1} parent=1 // pred_region
      %20 = dma.done [#allocation3], 128
    $region9: #{tpu_custom_call.1} parent=1 // pred_fallthru
      _
    %v21 = vld [vmem:[#allocation2] sm:$0xff]
    %22 = vst [vmem:[#allocation5] sm:$0xff] %v21
    // Predicated region
    $region10: #{tpu_custom_call.1} parent=1 // pred_check
      _
    $region11: #{tpu_custom_call.1} parent=1 // pred_check_branch
      %24 = sbr.rel (0) target = $region13
    $region12: #{tpu_custom_call.1} parent=1 // pred_region
      %s26 = ssub.s32 128, 128
      %27 = vsyncadd [#allocation4], %s26
      %s29 = sshll.u32 [#allocation5], 4
      %s30 = int_to_ptr.vmem [resolvable:$true] %s29
      %32 = dma.vmem_to_hbm [thread:$0]  %s30, 128, %s1, [#allocation4]
    $region13: #{tpu_custom_call.1} parent=1 // pred_fallthru
      _
    // Predicated region
    $region14: #{tpu_custom_call.1} parent=1 // pred_check
      _
    $region15: #{tpu_custom_call.1} parent=1 // pred_check_branch
      %34 = sbr.rel (0) target = $region17
    $region16: #{tpu_custom_call.1} parent=1 // pred_region
      %35 = dma.done [#allocation4], 128
    $region17: #{tpu_custom_call.1} parent=1 // pred_fallthru
      _
    %36 = vsyncpa [#allocation3], 1
    %37 = vsyncpa [#allocation4], 1

</llo_original>
